<compile_context>
chip_gen: v5e
topology: v5e:2x2
jax: 0.10.0
libtpu: 0.0.40
codegen_flags: <defaults>
</compile_context>

<pallas_src>
import functools

import jax
import jax.numpy as jnp
from jax import lax
from jax.experimental import pallas as pl
from jax.experimental.pallas import tpu as pltpu

DROPOUT_P = 0.125
INV_SCALE_FACTOR = 1.5


def _sdpa_dropout_kernel(q_ref, k_ref, v_ref, mask_ref, o_ref, *,
                         dropout_p, inv_scale_factor):
    # Batch dim is squeezed by the BlockSpecs, so refs are 2D:
    #   q_ref: (Lq, D) f32, k_ref: (Lk, D) bf16, v_ref: (Lk, dv_blk) bf16,
    #   mask_ref: (Lq, Lk) int8 keep-mask (0/1), o_ref: (Lq, dv_blk) f32.

    # Fold 1/inv_scale_factor into q (Lq*D multiplies instead of Lq*Lk),
    # then cast to bf16 so the MXU runs a native bf16 x bf16 -> f32 matmul.
    q = (q_ref[...] * jnp.float32(1.0 / inv_scale_factor)).astype(jnp.bfloat16)

    # scores = q @ k^T with the transpose absorbed into the contraction dims
    # (no explicit XLU transpose / K copy); accumulate in f32.
    scores = lax.dot_general(
        q, k_ref[...],
        dimension_numbers=(((1,), (1,)), ((), ())),
        preferred_element_type=jnp.float32)

    # Numerically stable softmax numerator + denominator (no divide here).
    m = jnp.max(scores, axis=-1, keepdims=True)
    e = jnp.exp(scores - m)
    denom = jnp.sum(e, axis=-1, keepdims=True)

    # Dropout: zero the dropped entries on the *unnormalized* exponentials.
    # The 1/denom normalization and 1/(1-p) survivor scaling are both linear,
    # so they are applied once to the (Lq, dv_blk) output instead of the
    # (Lq, Lk) probs tile.  Cast the PV LHS to bf16 for MXU throughput.
    masked = (e * mask_ref[...].astype(jnp.float32)).astype(jnp.bfloat16)

    out = jnp.dot(masked, v_ref[...], preferred_element_type=jnp.float32)

    # EUP approximate reciprocal (otherwise-idle slot) replaces the f32 divide.
    scale = pl.reciprocal(denom, approx=True) * jnp.float32(1.0 / (1.0 - dropout_p))
    o_ref[...] = (out * scale).astype(o_ref.dtype)


def sdpa_dropout(query, key, value, keep_mask,
                 dropout_p=DROPOUT_P, inv_scale_factor=INV_SCALE_FACTOR):
    B, Lq, D = query.shape
    _, Lk, Dk = key.shape
    _, Lv, Dv = value.shape
    assert D == Dk and Lk == Lv
    assert keep_mask.shape == (B, Lq, Lk)

    # Split Dv into lane-aligned blocks so the grid has >1 step (DMA overlap,
    # and v7x can shard the parallel axes across its two TensorCores).
    if Dv % 256 == 0 and Dv > 256:
        dv_block = 256
    elif Dv % 128 == 0 and Dv > 128:
        dv_block = 128
    else:
        dv_block = Dv
    n_dv = Dv // dv_block

    # Wrapper-side precision plumbing: bf16 K/V, int8 keep-mask.
    key_bf = key.astype(jnp.bfloat16)
    value_bf = value.astype(jnp.bfloat16)
    mask_i8 = keep_mask.astype(jnp.int8)

    kernel = functools.partial(_sdpa_dropout_kernel,
                               dropout_p=float(dropout_p),
                               inv_scale_factor=float(inv_scale_factor))

    cost = pl.CostEstimate(
        flops=2 * B * (n_dv * Lq * Lk * D + Lq * Lk * Dv),
        transcendentals=B * n_dv * Lq * Lk,
        bytes_accessed=(B * Lq * D * 4        # Q (f32)
                        + B * Lk * D * 2      # K (bf16)
                        + B * Lk * Dv * 2     # V (bf16)
                        + B * Lq * Lk * 1     # keep-mask (int8)
                        + B * Lq * Dv * 4))   # out (f32)

    return pl.pallas_call(
        kernel,
        out_shape=jax.ShapeDtypeStruct((B, Lq, Dv), jnp.float32),
        grid=(B, n_dv),
        in_specs=[
            # Q / K / mask do not depend on the Dv grid index -> fetched once
            # per batch, not once per Dv block.
            pl.BlockSpec((None, Lq, D), lambda b, j: (b, 0, 0)),
            pl.BlockSpec((None, Lk, D), lambda b, j: (b, 0, 0)),
            pl.BlockSpec((None, Lk, dv_block), lambda b, j: (b, 0, j)),
            pl.BlockSpec((None, Lq, Lk), lambda b, j: (b, 0, 0)),
        ],
        out_specs=pl.BlockSpec((None, Lq, dv_block), lambda b, j: (b, 0, j)),
        compiler_params=pltpu.CompilerParams(
            dimension_semantics=("parallel", "parallel")),
        cost_estimate=cost,
    )(query, key_bf, value_bf, mask_i8)


if __name__ == "__main__":
    # Shapes from the PyTorch spec: query (1,32,64), key (1,512,64), value (1,512,512)
    B, Lq, Lk, D, Dv = 1, 32, 512, 64, 512

    k0 = jax.random.PRNGKey(0)
    kq, kk, kv, kd = jax.random.split(k0, 4)
    query = jax.random.normal(kq, (B, Lq, D), dtype=jnp.float32)
    key = jax.random.normal(kk, (B, Lk, D), dtype=jnp.float32)
    value = jax.random.normal(kv, (B, Lk, Dv), dtype=jnp.float32)

    # Deterministic dropout keep-mask (keep prob = 1-p), generated host-side
    # so the kernel result is exactly reproducible against a JAX reference.
    keep_mask_bool = jax.random.bernoulli(kd, 1.0 - DROPOUT_P, (B, Lq, Lk))
    keep_mask_f32 = keep_mask_bool.astype(jnp.float32)

    out = sdpa_dropout(query, key, value, keep_mask_bool)
    jax.block_until_ready(out)
    assert out.shape == (B, Lq, Dv)
    assert bool(jnp.all(jnp.isfinite(out)))

    # Reference 1: mirrors the kernel's mixed precision (bf16 K/V/probs,
    # f32 accumulation) -> verifies the kernel logic tightly.
    q_s = (query / INV_SCALE_FACTOR).astype(jnp.bfloat16)
    k_bf = key.astype(jnp.bfloat16)
    v_bf = value.astype(jnp.bfloat16)
    scores_mx = jnp.einsum('bqd,bkd->bqk', q_s, k_bf,
                           preferred_element_type=jnp.float32)
    m_mx = jnp.max(scores_mx, axis=-1, keepdims=True)
    e_mx = jnp.exp(scores_mx - m_mx)
    denom_mx = jnp.sum(e_mx, axis=-1, keepdims=True)
    masked_mx = (e_mx * keep_mask_f32).astype(jnp.bfloat16)
    ref_mixed = jnp.einsum('bqk,bkd->bqd', masked_mx, v_bf,
                           preferred_element_type=jnp.float32)
    ref_mixed = ref_mixed / denom_mx / (1.0 - DROPOUT_P)
    assert jnp.allclose(out, ref_mixed, atol=3e-3, rtol=3e-3)

    # Reference 2: full-f32 PyTorch-semantics reference (looser bound, since
    # the kernel intentionally uses bf16 operands for K/V/probs).
    scores = jnp.einsum('bqd,bkd->bqk', query, key) / INV_SCALE_FACTOR
    probs = jax.nn.softmax(scores, axis=-1)
    ref_f32 = jnp.einsum('bqk,bkd->bqd', probs * keep_mask_f32, value) / (1.0 - DROPOUT_P)
    assert jnp.allclose(out, ref_f32, atol=7e-2, rtol=7e-2)

    print("KERNEL_OK")
</pallas_src>

<mosaic_0001>
module attributes {stable_mosaic.version = 11 : i64} {
  func.func @_sdpa_dropout_kernel(%arg0: i32, %arg1: i32, %arg2: memref<1x32x64xf32, #tpu.memory_space<vmem>>, %arg3: memref<1x512x64xbf16, #tpu.memory_space<vmem>>, %arg4: memref<1x512x256xbf16, #tpu.memory_space<vmem>>, %arg5: memref<1x32x512xi8, #tpu.memory_space<vmem>>, %arg6: memref<1x32x256xf32, #tpu.memory_space<vmem>>) attributes {dimension_semantics = [#tpu.dimension_semantics<parallel>, #tpu.dimension_semantics<parallel>], iteration_bounds = array<i64: 1, 2>, scalar_prefetch = 0 : i64, scratch_operands = 0 : i64, tpu.core_type = #tpu.core_type<tc>, window_params = [{transform_indices = @transform_0, window_bounds = array<i64: 1, 32, 64>}, {transform_indices = @transform_1, window_bounds = array<i64: 1, 512, 64>}, {transform_indices = @transform_2, window_bounds = array<i64: 1, 512, 256>}, {transform_indices = @transform_3, window_bounds = array<i64: 1, 32, 512>}, {transform_indices = @transform_4, window_bounds = array<i64: 1, 32, 256>}]} {
    %c0 = arith.constant 0 : index
    %c0_0 = arith.constant 0 : index
    %c0_1 = arith.constant 0 : index
    %0 = vector.load %arg2[%c0, %c0_0, %c0_1] : memref<1x32x64xf32, #tpu.memory_space<vmem>>, vector<1x32x64xf32>
    %1 = vector.shape_cast %0 : vector<1x32x64xf32> to vector<32x64xf32>
    %cst = arith.constant 0.666666686 : f32
    %2 = vector.broadcast %cst : f32 to vector<32x64xf32>
    %3 = arith.mulf %1, %2 : vector<32x64xf32>
    %4 = arith.truncf %3 : vector<32x64xf32> to vector<32x64xbf16>
    %c0_2 = arith.constant 0 : index
    %c0_3 = arith.constant 0 : index
    %c0_4 = arith.constant 0 : index
    %5 = vector.load %arg3[%c0_2, %c0_3, %c0_4] : memref<1x512x64xbf16, #tpu.memory_space<vmem>>, vector<1x512x64xbf16>
    %6 = vector.shape_cast %5 : vector<1x512x64xbf16> to vector<512x64xbf16>
    %cst_5 = arith.constant dense<0.000000e+00> : vector<32x512xf32>
    %7 = tpu.matmul %4, %6, %cst_5 {dimension_numbers = #tpu.dot_dimension_numbers<[1], [1], [0], [0], [0, 0, 1, 0], [], []>} : vector<32x64xbf16>, vector<512x64xbf16>, vector<32x512xf32> -> vector<32x512xf32>
    %cst_6 = arith.constant dense<0xFF800000> : vector<32xf32>
    %8 = vector.multi_reduction <maximumf>, %7, %cst_6 [1] : vector<32x512xf32> to vector<32xf32>
    %9 = vector.shape_cast %8 : vector<32xf32> to vector<32x1xf32>
    %10 = vector.broadcast %9 : vector<32x1xf32> to vector<32x512xf32>
    %11 = arith.subf %7, %10 : vector<32x512xf32>
    %12 = math.exp %11 : vector<32x512xf32>
    %cst_7 = arith.constant dense<0.000000e+00> : vector<32xf32>
    %13 = vector.multi_reduction <add>, %12, %cst_7 [1] : vector<32x512xf32> to vector<32xf32>
    %14 = vector.shape_cast %13 : vector<32xf32> to vector<32x1xf32>
    %c0_8 = arith.constant 0 : index
    %c0_9 = arith.constant 0 : index
    %c0_10 = arith.constant 0 : index
    %15 = vector.load %arg5[%c0_8, %c0_9, %c0_10] : memref<1x32x512xi8, #tpu.memory_space<vmem>>, vector<1x32x512xi8>
    %16 = vector.shape_cast %15 : vector<1x32x512xi8> to vector<32x512xi8>
    %17 = arith.sitofp %16 : vector<32x512xi8> to vector<32x512xf32>
    %18 = arith.mulf %12, %17 : vector<32x512xf32>
    %19 = arith.truncf %18 : vector<32x512xf32> to vector<32x512xbf16>
    %c0_11 = arith.constant 0 : index
    %c0_12 = arith.constant 0 : index
    %c0_13 = arith.constant 0 : index
    %20 = vector.load %arg4[%c0_11, %c0_12, %c0_13] : memref<1x512x256xbf16, #tpu.memory_space<vmem>>, vector<1x512x256xbf16>
    %21 = vector.shape_cast %20 : vector<1x512x256xbf16> to vector<512x256xbf16>
    %cst_14 = arith.constant dense<0.000000e+00> : vector<32x256xf32>
    %22 = tpu.matmul %19, %21, %cst_14 {dimension_numbers = #tpu.dot_dimension_numbers<[1], [0], [0], [1], [0, 0, 1, 1], [], []>} : vector<32x512xbf16>, vector<512x256xbf16>, vector<32x256xf32> -> vector<32x256xf32>
    %23 = tpu.reciprocal %14 {approx = true} : vector<32x1xf32> -> vector<32x1xf32>
    %cst_15 = arith.constant 1.14285719 : f32
    %24 = vector.broadcast %cst_15 : f32 to vector<32x1xf32>
    %25 = arith.mulf %23, %24 : vector<32x1xf32>
    %26 = vector.broadcast %25 : vector<32x1xf32> to vector<32x256xf32>
    %27 = arith.mulf %22, %26 : vector<32x256xf32>
    %c0_16 = arith.constant 0 : index
    %c0_17 = arith.constant 0 : index
    %c0_18 = arith.constant 0 : index
    %28 = vector.load %arg6[%c0_16, %c0_17, %c0_18] : memref<1x32x256xf32, #tpu.memory_space<vmem>>, vector<1x32x256xf32>
    %29 = vector.shape_cast %28 : vector<1x32x256xf32> to vector<32x256xf32>
    %30 = vector.shape_cast %27 : vector<32x256xf32> to vector<1x32x256xf32>
    tpu.vector_store %arg6[%c0_16, %c0_17, %c0_18], %30 {strides = array<i32>} : memref<1x32x256xf32, #tpu.memory_space<vmem>>, vector<1x32x256xf32>,
    return
  }
  func.func @transform_0(%arg0: i32, %arg1: i32) -> (i32, i32, i32) {
    %c0_i32 = arith.constant 0 : i32
    %c0_i32_0 = arith.constant 0 : i32
    %c0_i32_1 = arith.constant 0 : i32
    return %arg0, %c0_i32, %c0_i32_0 : i32, i32, i32
  }
  func.func @transform_1(%arg0: i32, %arg1: i32) -> (i32, i32, i32) {
    %c0_i32 = arith.constant 0 : i32
    %c0_i32_0 = arith.constant 0 : i32
    %c0_i32_1 = arith.constant 0 : i32
    return %arg0, %c0_i32, %c0_i32_0 : i32, i32, i32
  }
  func.func @transform_2(%arg0: i32, %arg1: i32) -> (i32, i32, i32) {
    %c0_i32 = arith.constant 0 : i32
    %c0_i32_0 = arith.constant 0 : i32
    return %arg0, %c0_i32, %arg1 : i32, i32, i32
  }
  func.func @transform_3(%arg0: i32, %arg1: i32) -> (i32, i32, i32) {
    %c0_i32 = arith.constant 0 : i32
    %c0_i32_0 = arith.constant 0 : i32
    %c0_i32_1 = arith.constant 0 : i32
    return %arg0, %c0_i32, %c0_i32_0 : i32, i32, i32
  }
  func.func @transform_4(%arg0: i32, %arg1: i32) -> (i32, i32, i32) {
    %c0_i32 = arith.constant 0 : i32
    %c0_i32_0 = arith.constant 0 : i32
    return %arg0, %c0_i32, %arg1 : i32, i32, i32
  }
}

</mosaic_0001>

<llo_original>
// kernel: tpu_custom_call.1
$region0: #{tpu_custom_call.1}
  #allocation0 [shape = 'u32[]', space=smem, size = 0x4, offset = 0x4, fixed_abs, tag = 'smem constant byte address 0x4 - core index']
  #allocation1 [shape = 'u32[72,128]{1,0:T(1,128)}', space=vmem, size = 0x9000, scoped, tag = 'internal scratch']
  %s0 = inlined_call_operand.vmem [shape: f32[1,32,64], index: 0, kind: input, shape index: {}]
  %s1 = inlined_call_operand.vmem [shape: bf16[1,512,64], index: 1, kind: input, shape index: {}]
  %s2 = inlined_call_operand.hbm [shape: bf16[1,512,512], index: 2, kind: input, shape index: {}]
  %s3 = inlined_call_operand.vmem [shape: s8[1,32,512], index: 3, kind: input, shape index: {}]
  %s4 = inlined_call_operand.hbm [shape: f32[1,32,512], index: 4, kind: output, shape index: {}]
  %s5 = sld [smem:[#allocation0]]
  $region53: #{tpu_custom_call.1} parent=0
    _
  %s7 = ssub.s32 1, %s5
  %s8 = scalar_select 0, %s7, %s5
  $region1: #{tpu_custom_call.1} parent=0
    #allocation2 [shape = 'u8[524288]{0}', space=vmem, size = 0x80000, scoped, tag = 'input window, operand 2']
    #allocation3 [shape = 's32[2]{0}', space=sflag, size = 0x8, scoped, tag = 'scoped memory for tpu_custom_call.1']
    #allocation4 [shape = 's32[2]{0}', space=sflag, size = 0x8, scoped, tag = 'scoped memory for tpu_custom_call.1']
    #allocation5 [shape = 'u8[65536]{0}', space=vmem, size = 0x10000, scoped, tag = 'output window, operand 0']
    %9 = vsyncpa [#allocation3], 0
    %s10 = scalar_lea.sflag [#allocation3], 1
    %11 = vsyncpa %s10, 0
    %12 = vsyncpa [#allocation4], 0
    %s13 = scalar_lea.sflag [#allocation4], 1
    %14 = vsyncpa %s13, 0
    loop: start=0, step=1, limit=4
    $region2: #{tpu_custom_call.1} parent=1 // loop_pre_header
      _
    $region3: #{tpu_custom_call.1} parent=1 // loop_header
      %s16 = sphi 0, %s20
      %p17 = scmp.ge.s32.totalorder %s16, 4
      %s23 = sphi 0, %s35
      %s24 = sphi 0, %s31
      %s25 = sphi 0, %s23
      %s26 = sphi 0, %s24
      %s27 = sphi 0, %s25
      %s28 = sphi 0, %s26
      %s38 = sphi 0, %s40
      %s41 = sphi 0, %s38
      %s42 = sphi 0, %s41
      %s58 = sphi 0, %s42
      %s64 = sphi 0, %s66
      %s67 = sphi 0, %s64
      %s68 = sphi 0, %s67
      %s84 = sphi 0, %s68
      %s92 = sphi 0, %s94
      %s95 = sphi 0, %s92
      %s96 = sphi 0, %s95
      %s112 = sphi 0, %s96
      %s118 = sphi 0, %s120
      %s121 = sphi 0, %s118
      %s122 = sphi 0, %s121
      %s138 = sphi 0, %s122
      %s146 = sphi 0, %s148
      %s149 = sphi 0, %s146
      %s150 = sphi 0, %s149
      %s166 = sphi 0, %s150
    $region4: #{tpu_custom_call.1} parent=1 // loop_header_branch
      %19 = sbr.rel (%p17) target = $region8
    $region5: #{tpu_custom_call.1} parent=1 // loop_body
      %s21 = ssub.s32 %s16, 1
      %s22 = ssub.s32 %s16, 2
      %s29 = sadd.s32 1, %s24
      %p30 = scmp.ge.s32.totalorder %s29, 2
      %s31 = scalar_select %p30, 0, %s29
      %s32 = sadd.s32 1, %s23
      %s33 = scalar_select %p30, %s32, %s23
      %p34 = scmp.ge.s32.totalorder %s33, 1
      %s35 = scalar_select %p34, 0, %s33
      %s36 = ssub.s32 %s23, %s35
      %p37 = scmp.eq.s32.totalorder %s36, 0
      %s39 = sadd.s32 %s38, 1
      %s40 = scalar_select %p37, %s38, %s39
      %p43 = pneg %p37
      %p44 = scmp.eq.s32.totalorder %s16, 1
      %p45 = por %p43, %p44
      %p46 = scmp.ne.s32.totalorder %s38, %s41
      %p47 = scmp.eq.s32.totalorder %s16, 0
      %p48 = por %p46, %p47
      %p49 = scmp.ne.s32.totalorder %s38, %s41
      %p50 = scmp.eq.s32.totalorder %s21, 1
      %p51 = por %p49, %p50
      %p52 = scmp.ne.s32.totalorder %s41, %s42
      %p53 = scmp.eq.s32.totalorder %s21, 0
      %p54 = por %p52, %p53
      %p55 = scmp.ne.s32.totalorder %s41, %s42
      %p56 = scmp.eq.s32.totalorder %s22, 1
      %p57 = por %p55, %p56
      %p59 = scmp.ne.s32.totalorder %s42, %s58
      %p60 = scmp.eq.s32.totalorder %s22, 0
      %p61 = por %p59, %p60
      %s62 = ssub.s32 %s23, %s35
      %p63 = scmp.eq.s32.totalorder %s62, 0
      %s65 = sadd.s32 %s64, 1
      %s66 = scalar_select %p63, %s64, %s65
      %p69 = pneg %p63
      %p70 = scmp.eq.s32.totalorder %s16, 1
      %p71 = por %p69, %p70
      %p72 = scmp.ne.s32.totalorder %s64, %s67
      %p73 = scmp.eq.s32.totalorder %s16, 0
      %p74 = por %p72, %p73
      %p75 = scmp.ne.s32.totalorder %s64, %s67
      %p76 = scmp.eq.s32.totalorder %s21, 1
      %p77 = por %p75, %p76
      %p78 = scmp.ne.s32.totalorder %s67, %s68
      %p79 = scmp.eq.s32.totalorder %s21, 0
      %p80 = por %p78, %p79
      %p81 = scmp.ne.s32.totalorder %s67, %s68
      %p82 = scmp.eq.s32.totalorder %s22, 1
      %p83 = por %p81, %p82
      %p85 = scmp.ne.s32.totalorder %s68, %s84
      %p86 = scmp.eq.s32.totalorder %s22, 0
      %p87 = por %p85, %p86
      %s88 = ssub.s32 %s23, %s35
      %s89 = ssub.s32 %s24, %s31
      %s90 = sor.u32 %s88, %s89
      %p91 = scmp.eq.s32.totalorder %s90, 0
      %s93 = sadd.s32 %s92, 1
      %s94 = scalar_select %p91, %s92, %s93
      %p97 = pneg %p91
      %p98 = scmp.eq.s32.totalorder %s16, 1
      %p99 = por %p97, %p98
      %p100 = scmp.ne.s32.totalorder %s92, %s95
      %p101 = scmp.eq.s32.totalorder %s16, 0
      %p102 = por %p100, %p101
      %p103 = scmp.ne.s32.totalorder %s92, %s95
      %p104 = scmp.eq.s32.totalorder %s21, 1
      %p105 = por %p103, %p104
      %p106 = scmp.ne.s32.totalorder %s95, %s96
      %p107 = scmp.eq.s32.totalorder %s21, 0
      %p108 = por %p106, %p107
      %p109 = scmp.ne.s32.totalorder %s95, %s96
      %p110 = scmp.eq.s32.totalorder %s22, 1
      %p111 = por %p109, %p110
      %p113 = scmp.ne.s32.totalorder %s96, %s112
      %p114 = scmp.eq.s32.totalorder %s22, 0
      %p115 = por %p113, %p114
      %s116 = ssub.s32 %s23, %s35
      %p117 = scmp.eq.s32.totalorder %s116, 0
      %s119 = sadd.s32 %s118, 1
      %s120 = scalar_select %p117, %s118, %s119
      %p123 = pneg %p117
      %p124 = scmp.eq.s32.totalorder %s16, 1
      %p125 = por %p123, %p124
      %p126 = scmp.ne.s32.totalorder %s118, %s121
      %p127 = scmp.eq.s32.totalorder %s16, 0
      %p128 = por %p126, %p127
      %p129 = scmp.ne.s32.totalorder %s118, %s121
      %p130 = scmp.eq.s32.totalorder %s21, 1
      %p131 = por %p129, %p130
      %p132 = scmp.ne.s32.totalorder %s121, %s122
      %p133 = scmp.eq.s32.totalorder %s21, 0
      %p134 = por %p132, %p133
      %p135 = scmp.ne.s32.totalorder %s121, %s122
      %p136 = scmp.eq.s32.totalorder %s22, 1
      %p137 = por %p135, %p136
      %p139 = scmp.ne.s32.totalorder %s122, %s138
      %p140 = scmp.eq.s32.totalorder %s22, 0
      %p141 = por %p139, %p140
      %s142 = ssub.s32 %s23, %s35
      %s143 = ssub.s32 %s24, %s31
      %s144 = sor.u32 %s142, %s143
      %p145 = scmp.eq.s32.totalorder %s144, 0
      %s147 = sadd.s32 %s146, 1
      %s148 = scalar_select %p145, %s146, %s147
      %p151 = pneg %p145
      %p152 = scmp.eq.s32.totalorder %s16, 1
      %p153 = por %p151, %p152
      %p154 = scmp.ne.s32.totalorder %s146, %s149
      %p155 = scmp.eq.s32.totalorder %s16, 0
      %p156 = por %p154, %p155
      %p157 = scmp.ne.s32.totalorder %s146, %s149
      %p158 = scmp.eq.s32.totalorder %s21, 1
      %p159 = por %p157, %p158
      %p160 = scmp.ne.s32.totalorder %s149, %s150
      %p161 = scmp.eq.s32.totalorder %s21, 0
      %p162 = por %p160, %p161
      %p163 = scmp.ne.s32.totalorder %s149, %s150
      %p164 = scmp.eq.s32.totalorder %s22, 1
      %p165 = por %p163, %p164
      %p167 = scmp.ne.s32.totalorder %s150, %s166
      %p168 = scmp.eq.s32.totalorder %s22, 0
      %p169 = por %p167, %p168
      %p170 = scmp.le.s32.totalorder 1, %s16
      %p171 = scmp.lt.s32.totalorder %s16, 3
      %p172 = pnand %p170, %p171
      %p173 = pneg %p172
      // Predicated region
      $region9: #{tpu_custom_call.1} parent=5 // pred_check
        _
      $region10: #{tpu_custom_call.1} parent=5 // pred_check_branch
        %175 = sbr.rel (%p172) target = $region12
      $region11: #{tpu_custom_call.1} parent=5 // pred_region
        %s176 = ssub.s32 %s16, 1
        // Predicated region
        $region13: #{tpu_custom_call.1} parent=11 // pred_check
          %p177 = pneg %p54
        $region14: #{tpu_custom_call.1} parent=11 // pred_check_branch
          %179 = sbr.rel (%p177) target = $region16
        $region15: #{tpu_custom_call.1} parent=11 // pred_region
          %p180 = scmp.lt.s32.totalorder %s25, 0
          %s181 = scalar_select %p180, %s25, 0
          %s182 = smul.addr %s181, 4
          %s183 = smul.addr %s182, 8
          %s184 = scalar_lea.vmem %s0, %s183
        $region16: #{tpu_custom_call.1} parent=11 // pred_fallthru
          _
        // Predicated region
        $region17: #{tpu_custom_call.1} parent=11 // pred_check
          %p185 = pneg %p80
        $region18: #{tpu_custom_call.1} parent=11 // pred_check_branch
          %187 = sbr.rel (%p185) target = $region20
        $region19: #{tpu_custom_call.1} parent=11 // pred_region
          %p188 = scmp.lt.s32.totalorder %s25, 0
          %s189 = scalar_select %p188, %s25, 0
          %s190 = smul.addr %s189, 64
          %s191 = smul.addr %s190, 4
          %s192 = scalar_lea.vmem %s1, %s191
        $region20: #{tpu_custom_call.1} parent=11 // pred_fallthru
          _
        // Predicated region
        $region21: #{tpu_custom_call.1} parent=11 // pred_check
          %p193 = pneg %p134
        $region22: #{tpu_custom_call.1} parent=11 // pred_check_branch
          %195 = sbr.rel (%p193) target = $region24
        $region23: #{tpu_custom_call.1} parent=11 // pred_region
          %p196 = scmp.lt.s32.totalorder %s25, 0
          %s197 = scalar_select %p196, %s25, 0
          %s198 = smul.addr %s197, 4
          %s199 = smul.addr %s198, 8
          %s200 = scalar_lea.vmem %s3, %s199
        $region24: #{tpu_custom_call.1} parent=11 // pred_fallthru
          _
      $region12: #{tpu_custom_call.1} parent=5 // pred_fallthru
        _
      %p201 = scmp.lt.s32.totalorder %s16, 2
      // Predicated region
      $region25: #{tpu_custom_call.1} parent=5 // pred_check
        %p202 = pneg %p201
      $region26: #{tpu_custom_call.1} parent=5 // pred_check_branch
        %204 = sbr.rel (%p202) target = $region28
      $region27: #{tpu_custom_call.1} parent=5 // pred_region
        // Predicated region
        $region29: #{tpu_custom_call.1} parent=27 // pred_check
          %p205 = pneg %p102
        $region30: #{tpu_custom_call.1} parent=27 // pred_check_branch
          %207 = sbr.rel (%p205) target = $region32
        $region31: #{tpu_custom_call.1} parent=27 // pred_region
          %s208 = sand.u32 %s92, 1
          %s209 = scalar_lea.sflag [#allocation3], %s208
          %s210 = sand.u32 %s92, 1
          %s211 = smul.addr %s210, 512
          %s212 = scalar_lea.vmem [#allocation2], %s211
          %s213 = smul.u32 2, %s24
          %215 = vsyncadd %s209, 0
          %s216 = smul.addr %s23, 256
          %s217 = sadd.s32 %s213, %s216
          %s218 = smul.addr %s217, 4
          %s219 = scalar_lea.hbm %s2, %s218
          %s220 = sshll.u32 %s219, 4
          %s221 = int_to_ptr.hbm [resolvable:$true] %s220
          %s222 = sshll.u32 %s212, 4
          %s223 = int_to_ptr.vmem [resolvable:$true] %s222
          %228 = dma.hbm_to_vmem [thread:$0]  %s221, 8192, %s223, %s209, 256, 128, 8
        $region32: #{tpu_custom_call.1} parent=27 // pred_fallthru
          _
      $region28: #{tpu_custom_call.1} parent=5 // pred_fallthru
        _
      %p229 = scmp.le.s32.totalorder 1, %s16
      %p230 = scmp.lt.s32.totalorder %s16, 3
      %p231 = pnand %p229, %p230
      %p232 = pneg %p231
      // Predicated region
      $region33: #{tpu_custom_call.1} parent=5 // pred_check
        _
      $region34: #{tpu_custom_call.1} parent=5 // pred_check_branch
        %234 = sbr.rel (%p231) target = $region36
      $region35: #{tpu_custom_call.1} parent=5 // pred_region
        %s235 = ssub.s32 %s16, 1
        %s236 = sand.u32 %s95, 1
        %s237 = scalar_lea.sflag [#allocation3], %s236
        %s238 = sand.u32 %s95, 1
        %s239 = smul.addr %s238, 512
        %s240 = scalar_lea.vmem [#allocation2], %s239
        // Predicated region
        $region37: #{tpu_custom_call.1} parent=35 // pred_check
          %p241 = pneg %p108
        $region38: #{tpu_custom_call.1} parent=35 // pred_check_branch
          %243 = sbr.rel (%p241) target = $region40
        $region39: #{tpu_custom_call.1} parent=35 // pred_region
          %245 = dma.done %s237, 8192
        $region40: #{tpu_custom_call.1} parent=35 // pred_fallthru
          _
        %p246 = scmp.lt.s32.totalorder %s25, 0
        %s247 = scalar_select %p246, %s25, 0
        %s248 = smul.addr %s247, 4
        %s249 = smul.addr %s248, 8
        %s250 = scalar_lea.vmem %s0, %s249
        %p251 = pneg %p54
        %p252 = pneg %p51
        %p253 = scmp.lt.s32.totalorder %s25, 0
        %s254 = scalar_select %p253, %s25, 0
        %s255 = smul.addr %s254, 64
        %s256 = smul.addr %s255, 4
        %s257 = scalar_lea.vmem %s1, %s256
        %p258 = pneg %p80
        %p259 = pneg %p77
        %s260 = sand.u32 %s95, 1
        %s261 = scalar_lea.sflag [#allocation3], %s260
        %s262 = sand.u32 %s95, 1
        %s263 = smul.addr %s262, 512
        %s264 = scalar_lea.vmem [#allocation2], %s263
        %p265 = pneg %p108
        %p266 = pneg %p105
        %p267 = scmp.lt.s32.totalorder %s25, 0
        %s268 = scalar_select %p267, %s25, 0
        %s269 = smul.addr %s268, 4
        %s270 = smul.addr %s269, 8
        %s271 = scalar_lea.vmem %s3, %s270
        %p272 = pneg %p134
        %p273 = pneg %p131
        %p274 = pneg %p162
        %p275 = pneg %p159
        %s276 = sand.u32 %s149, 1
        %s277 = scalar_lea.sflag [#allocation4], %s276
        %s278 = sand.u32 %s149, 1
        %s279 = smul.addr %s278, 64
        %s280 = scalar_lea.vmem [#allocation5], %s279
        %p281 = scmp.lt.s32.totalorder %s25, 0
        %s282 = scalar_select %p281, %s25, 0
        %s283 = smul.addr %s282, 4
        %s284 = smul.addr %s283, 8
        %s285 = scalar_lea.vmem %s0, %s284
        %p286 = scmp.lt.s32.totalorder %s25, 0
        %s287 = scalar_select %p286, %s25, 0
        %s288 = smul.addr %s287, 64
        %s289 = smul.addr %s288, 4
        %s290 = scalar_lea.vmem %s1, %s289
        %s291 = smul.u32 2, %s26
        %p292 = scmp.lt.s32.totalorder %s25, 0
        %s293 = scalar_select %p292, %s25, 0
        %s294 = smul.addr %s293, 4
        %s295 = smul.addr %s294, 8
        %s296 = scalar_lea.vmem %s3, %s295
        %s297 = smul.u32 2, %s26
        %v298 = vld [vmem:[%s285] sm:$0xff]
        %v299 = vld [vmem:[%s285 + $0x8] sm:$0xff]
        %v300 = vld [vmem:[%s285 + $0x10] sm:$0xff]
        %v301 = vld [vmem:[%s285 + $0x18] sm:$0xff]
        %v302 = vmul.f32 %v298, 0.6666667
        %v303 = vmul.f32 %v299, 0.6666667
        %v304 = vmul.f32 %v300, 0.6666667
        %v305 = vmul.f32 %v301, 0.6666667
        %v306 = vpack.c.bf16 %v303, %v302
        %v307 = vpack.c.bf16 %v305, %v304
        %v308 = vld [vmem:[%s290] sm:$0xf]
        %v309 = vld [vmem:[%s290 + $0x4] sm:$0xf]
        %v310 = vld [vmem:[%s290 + $0x8] sm:$0xf]
        %v311 = vld [vmem:[%s290 + $0xc] sm:$0xf]
        %v312 = vld [vmem:[%s290 + $0x10] sm:$0xf]
        %v313 = vld [vmem:[%s290 + $0x14] sm:$0xf]
        %v314 = vld [vmem:[%s290 + $0x18] sm:$0xf]
        %v315 = vld [vmem:[%s290 + $0x1c] sm:$0xf]
        %v316 = vld [vmem:[%s290 + $0x20] sm:$0xf]
        %v317 = vld [vmem:[%s290 + $0x24] sm:$0xf]
        %v318 = vld [vmem:[%s290 + $0x28] sm:$0xf]
        %v319 = vld [vmem:[%s290 + $0x2c] sm:$0xf]
        %v320 = vld [vmem:[%s290 + $0x30] sm:$0xf]
        %v321 = vld [vmem:[%s290 + $0x34] sm:$0xf]
        %v322 = vld [vmem:[%s290 + $0x38] sm:$0xf]
        %v323 = vld [vmem:[%s290 + $0x3c] sm:$0xf]
        %v324 = vld [vmem:[%s290 + $0x40] sm:$0xf]
        %v325 = vld [vmem:[%s290 + $0x44] sm:$0xf]
        %v326 = vld [vmem:[%s290 + $0x48] sm:$0xf]
        %v327 = vld [vmem:[%s290 + $0x4c] sm:$0xf]
        %v328 = vld [vmem:[%s290 + $0x50] sm:$0xf]
        %v329 = vld [vmem:[%s290 + $0x54] sm:$0xf]
        %v330 = vld [vmem:[%s290 + $0x58] sm:$0xf]
        %v331 = vld [vmem:[%s290 + $0x5c] sm:$0xf]
        %v332 = vld [vmem:[%s290 + $0x60] sm:$0xf]
        %v333 = vld [vmem:[%s290 + $0x64] sm:$0xf]
        %v334 = vld [vmem:[%s290 + $0x68] sm:$0xf]
        %v335 = vld [vmem:[%s290 + $0x6c] sm:$0xf]
        %v336 = vld [vmem:[%s290 + $0x70] sm:$0xf]
        %v337 = vld [vmem:[%s290 + $0x74] sm:$0xf]
        %v338 = vld [vmem:[%s290 + $0x78] sm:$0xf]
        %v339 = vld [vmem:[%s290 + $0x7c] sm:$0xf]
        %v340 = vld [vmem:[%s290 + $0x80] sm:$0xf]
        %v341 = vld [vmem:[%s290 + $0x84] sm:$0xf]
        %v342 = vld [vmem:[%s290 + $0x88] sm:$0xf]
        %v343 = vld [vmem:[%s290 + $0x8c] sm:$0xf]
        %v344 = vld [vmem:[%s290 + $0x90] sm:$0xf]
        %v345 = vld [vmem:[%s290 + $0x94] sm:$0xf]
        %v346 = vld [vmem:[%s290 + $0x98] sm:$0xf]
        %v347 = vld [vmem:[%s290 + $0x9c] sm:$0xf]
        %v348 = vld [vmem:[%s290 + $0xa0] sm:$0xf]
        %v349 = vld [vmem:[%s290 + $0xa4] sm:$0xf]
        %v350 = vld [vmem:[%s290 + $0xa8] sm:$0xf]
        %v351 = vld [vmem:[%s290 + $0xac] sm:$0xf]
        %v352 = vld [vmem:[%s290 + $0xb0] sm:$0xf]
        %v353 = vld [vmem:[%s290 + $0xb4] sm:$0xf]
        %v354 = vld [vmem:[%s290 + $0xb8] sm:$0xf]
        %v355 = vld [vmem:[%s290 + $0xbc] sm:$0xf]
        %v356 = vld [vmem:[%s290 + $0xc0] sm:$0xf]
        %v357 = vld [vmem:[%s290 + $0xc4] sm:$0xf]
        %v358 = vld [vmem:[%s290 + $0xc8] sm:$0xf]
        %v359 = vld [vmem:[%s290 + $0xcc] sm:$0xf]
        %v360 = vld [vmem:[%s290 + $0xd0] sm:$0xf]
        %v361 = vld [vmem:[%s290 + $0xd4] sm:$0xf]
        %v362 = vld [vmem:[%s290 + $0xd8] sm:$0xf]
        %v363 = vld [vmem:[%s290 + $0xdc] sm:$0xf]
        %v364 = vld [vmem:[%s290 + $0xe0] sm:$0xf]
        %v365 = vld [vmem:[%s290 + $0xe4] sm:$0xf]
        %v366 = vld [vmem:[%s290 + $0xe8] sm:$0xf]
        %v367 = vld [vmem:[%s290 + $0xec] sm:$0xf]
        %v368 = vld [vmem:[%s290 + $0xf0] sm:$0xf]
        %v369 = vld [vmem:[%s290 + $0xf4] sm:$0xf]
        %v370 = vld [vmem:[%s290 + $0xf8] sm:$0xf]
        %v371 = vld [vmem:[%s290 + $0xfc] sm:$0xf]
        %v436 = vunpack.c.l.b16 %v308
        %v437 = vunpack.c.l.b16 %v309
        %v438 = vunpack.c.l.b16 %v310
        %v439 = vunpack.c.l.b16 %v311
        %v440 = vunpack.c.l.b16 %v312
        %v441 = vunpack.c.l.b16 %v313
        %v442 = vunpack.c.l.b16 %v314
        %v443 = vunpack.c.l.b16 %v315
        %v444 = vunpack.c.l.b16 %v316
        %v445 = vunpack.c.l.b16 %v317
        %v446 = vunpack.c.l.b16 %v318
        %v447 = vunpack.c.l.b16 %v319
        %v448 = vunpack.c.l.b16 %v320
        %v449 = vunpack.c.l.b16 %v321
        %v450 = vunpack.c.l.b16 %v322
        %v451 = vunpack.c.l.b16 %v323
        %v452 = vunpack.c.l.b16 %v324
        %v453 = vunpack.c.l.b16 %v325
        %v454 = vunpack.c.l.b16 %v326
        %v455 = vunpack.c.l.b16 %v327
        %v456 = vunpack.c.l.b16 %v328
        %v457 = vunpack.c.l.b16 %v329
        %v458 = vunpack.c.l.b16 %v330
        %v459 = vunpack.c.l.b16 %v331
        %v460 = vunpack.c.l.b16 %v332
        %v461 = vunpack.c.l.b16 %v333
        %v462 = vunpack.c.l.b16 %v334
        %v463 = vunpack.c.l.b16 %v335
        %v464 = vunpack.c.l.b16 %v336
        %v465 = vunpack.c.l.b16 %v337
        %v466 = vunpack.c.l.b16 %v338
        %v467 = vunpack.c.l.b16 %v339
        %v468 = vunpack.c.l.b16 %v340
        %v469 = vunpack.c.l.b16 %v341
        %v470 = vunpack.c.l.b16 %v342
        %v471 = vunpack.c.l.b16 %v343
        %v472 = vunpack.c.l.b16 %v344
        %v473 = vunpack.c.l.b16 %v345
        %v474 = vunpack.c.l.b16 %v346
        %v475 = vunpack.c.l.b16 %v347
        %v476 = vunpack.c.l.b16 %v348
        %v477 = vunpack.c.l.b16 %v349
        %v478 = vunpack.c.l.b16 %v350
        %v479 = vunpack.c.l.b16 %v351
        %v480 = vunpack.c.l.b16 %v352
        %v481 = vunpack.c.l.b16 %v353
        %v482 = vunpack.c.l.b16 %v354
        %v483 = vunpack.c.l.b16 %v355
        %v484 = vunpack.c.l.b16 %v356
        %v485 = vunpack.c.l.b16 %v357
        %v486 = vunpack.c.l.b16 %v358
        %v487 = vunpack.c.l.b16 %v359
        %v488 = vunpack.c.l.b16 %v360
        %v489 = vunpack.c.l.b16 %v361
        %v490 = vunpack.c.l.b16 %v362
        %v491 = vunpack.c.l.b16 %v363
        %v492 = vunpack.c.l.b16 %v364
        %v493 = vunpack.c.l.b16 %v365
        %v494 = vunpack.c.l.b16 %v366
        %v495 = vunpack.c.l.b16 %v367
        %v496 = vunpack.c.l.b16 %v368
        %v497 = vunpack.c.l.b16 %v369
        %v498 = vunpack.c.l.b16 %v370
        %v499 = vunpack.c.l.b16 %v371
        %v500 = vpack.c.b16 %v437, %v436
        %v501 = vpack.c.b16 %v439, %v438
        %v502 = vpack.c.b16 %v441, %v440
        %v503 = vpack.c.b16 %v443, %v442
        %v504 = vpack.c.b16 %v445, %v444
        %v505 = vpack.c.b16 %v447, %v446
        %v506 = vpack.c.b16 %v449, %v448
        %v507 = vpack.c.b16 %v451, %v450
        %v508 = vpack.c.b16 %v453, %v452
        %v509 = vpack.c.b16 %v455, %v454
        %v510 = vpack.c.b16 %v457, %v456
        %v511 = vpack.c.b16 %v459, %v458
        %v512 = vpack.c.b16 %v461, %v460
        %v513 = vpack.c.b16 %v463, %v462
        %v514 = vpack.c.b16 %v465, %v464
        %v515 = vpack.c.b16 %v467, %v466
        %v516 = vpack.c.b16 %v469, %v468
        %v517 = vpack.c.b16 %v471, %v470
        %v518 = vpack.c.b16 %v473, %v472
        %v519 = vpack.c.b16 %v475, %v474
        %v520 = vpack.c.b16 %v477, %v476
        %v521 = vpack.c.b16 %v479, %v478
        %v522 = vpack.c.b16 %v481, %v480
        %v523 = vpack.c.b16 %v483, %v482
        %v524 = vpack.c.b16 %v485, %v484
        %v525 = vpack.c.b16 %v487, %v486
        %v526 = vpack.c.b16 %v489, %v488
        %v527 = vpack.c.b16 %v491, %v490
        %v528 = vpack.c.b16 %v493, %v492
        %v529 = vpack.c.b16 %v495, %v494
        %v530 = vpack.c.b16 %v497, %v496
        %v531 = vpack.c.b16 %v499, %v498
        %vm532 = vcmask 523264
        %v534 = vsel %vm532, %v306, 0
        %v537 = vsel %vm532, %v307, 0
        %v540 = vsel %vm532, %v500, 0
        %v543 = vsel %vm532, %v501, 0
        %v546 = vsel %vm532, %v502, 0
        %v549 = vsel %vm532, %v503, 0
        %v552 = vsel %vm532, %v504, 0
        %v555 = vsel %vm532, %v505, 0
        %v558 = vsel %vm532, %v506, 0
        %v561 = vsel %vm532, %v507, 0
        %v564 = vsel %vm532, %v508, 0
        %v567 = vsel %vm532, %v509, 0
        %v570 = vsel %vm532, %v510, 0
        %v573 = vsel %vm532, %v511, 0
        %v576 = vsel %vm532, %v512, 0
        %v579 = vsel %vm532, %v513, 0
        %v582 = vsel %vm532, %v514, 0
        %v585 = vsel %vm532, %v515, 0
        %v588 = vsel %vm532, %v516, 0
        %v591 = vsel %vm532, %v517, 0
        %v594 = vsel %vm532, %v518, 0
        %v597 = vsel %vm532, %v519, 0
        %v600 = vsel %vm532, %v520, 0
        %v603 = vsel %vm532, %v521, 0
        %v606 = vsel %vm532, %v522, 0
        %v609 = vsel %vm532, %v523, 0
        %v612 = vsel %vm532, %v524, 0
        %v615 = vsel %vm532, %v525, 0
        %v618 = vsel %vm532, %v526, 0
        %v621 = vsel %vm532, %v527, 0
        %v624 = vsel %vm532, %v528, 0
        %v627 = vsel %vm532, %v529, 0
        %v630 = vsel %vm532, %v530, 0
        %v633 = vsel %vm532, %v531, 0
        %635 = vmatpush.bf16.xpose.msra.mxu0 %v561
        %636 = vmatpush.bf16.xpose.msra.mxu0 %v558
        %637 = vmatpush.bf16.xpose.msra.mxu0 %v555
        %638 = vmatpush.bf16.xpose.msra.mxu0 %v552
        %639 = vmatpush.bf16.xpose.msra.mxu0 %v549
        %640 = vmatpush.bf16.xpose.msra.mxu0 %v546
        %641 = vmatpush.bf16.xpose.msra.mxu0 %v543
        %642 = vmatpush.bf16.xpose.msra.mxu0 %v540
        %643 = vmatmul.bf16.gmra.mxu0 %v534
        %v644 = vpop.f32.mrf.mxu0
        %v645 = vadd.f32 0.0, %v644
        %v646 = vpop.f32.mrf.mxu0
        %v647 = vadd.f32 0.0, %v646
        %648 = vmatmul.bf16.gmra.mxu0 %v537
        %v649 = vpop.f32.mrf.mxu0
        %v650 = vadd.f32 0.0, %v649
        %v651 = vpop.f32.mrf.mxu0
        %v652 = vadd.f32 0.0, %v651
        %653 = vdwg.mxu0
        %654 = vmatpush.bf16.xpose.msra.mxu0 %v585
        %655 = vmatpush.bf16.xpose.msra.mxu0 %v582
        %656 = vmatpush.bf16.xpose.msra.mxu0 %v579
        %657 = vmatpush.bf16.xpose.msra.mxu0 %v576
        %658 = vmatpush.bf16.xpose.msra.mxu0 %v573
        %659 = vmatpush.bf16.xpose.msra.mxu0 %v570
        %660 = vmatpush.bf16.xpose.msra.mxu0 %v567
        %661 = vmatpush.bf16.xpose.msra.mxu0 %v564
        %662 = vmatmul.bf16.gmra.mxu0 %v534
        %v663 = vpop.f32.mrf.mxu0
        %v664 = vadd.f32 0.0, %v663
        %v665 = vpop.f32.mrf.mxu0
        %v666 = vadd.f32 0.0, %v665
        %667 = vmatmul.bf16.gmra.mxu0 %v537
        %v668 = vpop.f32.mrf.mxu0
        %v669 = vadd.f32 0.0, %v668
        %v670 = vpop.f32.mrf.mxu0
        %v671 = vadd.f32 0.0, %v670
        %672 = vdwg.mxu0
        %673 = vmatpush.bf16.xpose.msra.mxu0 %v609
        %674 = vmatpush.bf16.xpose.msra.mxu0 %v606
        %675 = vmatpush.bf16.xpose.msra.mxu0 %v603
        %676 = vmatpush.bf16.xpose.msra.mxu0 %v600
        %677 = vmatpush.bf16.xpose.msra.mxu0 %v597
        %678 = vmatpush.bf16.xpose.msra.mxu0 %v594
        %679 = vmatpush.bf16.xpose.msra.mxu0 %v591
        %680 = vmatpush.bf16.xpose.msra.mxu0 %v588
        %681 = vmatmul.bf16.gmra.mxu0 %v534
        %v682 = vpop.f32.mrf.mxu0
        %v683 = vadd.f32 0.0, %v682
        %v684 = vpop.f32.mrf.mxu0
        %v685 = vadd.f32 0.0, %v684
        %686 = vmatmul.bf16.gmra.mxu0 %v537
        %v687 = vpop.f32.mrf.mxu0
        %v688 = vadd.f32 0.0, %v687
        %v689 = vpop.f32.mrf.mxu0
        %v690 = vadd.f32 0.0, %v689
        %691 = vdwg.mxu0
        %692 = vmatpush.bf16.xpose.msra.mxu0 %v633
        %693 = vmatpush.bf16.xpose.msra.mxu0 %v630
        %694 = vmatpush.bf16.xpose.msra.mxu0 %v627
        %695 = vmatpush.bf16.xpose.msra.mxu0 %v624
        %696 = vmatpush.bf16.xpose.msra.mxu0 %v621
        %697 = vmatpush.bf16.xpose.msra.mxu0 %v618
        %698 = vmatpush.bf16.xpose.msra.mxu0 %v615
        %699 = vmatpush.bf16.xpose.msra.mxu0 %v612
        %700 = vmatmul.bf16.gmra.mxu0 %v534
        %v701 = vpop.f32.mrf.mxu0
        %v702 = vadd.f32 0.0, %v701
        %v703 = vpop.f32.mrf.mxu0
        %v704 = vadd.f32 0.0, %v703
        %705 = vmatmul.bf16.gmra.mxu0 %v537
        %v706 = vpop.f32.mrf.mxu0
        %v707 = vadd.f32 0.0, %v706
        %v708 = vpop.f32.mrf.mxu0
        %v709 = vadd.f32 0.0, %v708
        %710 = vdwg.mxu0
        %v711 = vmax.f32 %v645, %v664
        %v712 = vmax.f32 %v711, %v683
        %v713 = vmax.f32 %v712, %v702
        %714 = vmax.xlane.f32.xlu0 %v713
        %v715 = vpop.xlane.xlu0 %714
        %v716 = vmax.f32 %v647, %v666
        %v717 = vmax.f32 %v716, %v685
        %v718 = vmax.f32 %v717, %v704
        %719 = vmax.xlane.f32.xlu0 %v718
        %v720 = vpop.xlane.xlu0 %719
        %v721 = vmax.f32 %v650, %v669
        %v722 = vmax.f32 %v721, %v688
        %v723 = vmax.f32 %v722, %v707
        %724 = vmax.xlane.f32.xlu0 %v723
        %v725 = vpop.xlane.xlu0 %724
        %v726 = vmax.f32 %v652, %v671
        %v727 = vmax.f32 %v726, %v690
        %v728 = vmax.f32 %v727, %v709
        %729 = vmax.xlane.f32.xlu0 %v728
        %v730 = vpop.xlane.xlu0 %729
        %v731 = vsub.f32 %v645, %v715
        %v732 = vsub.f32 %v664, %v715
        %v733 = vsub.f32 %v683, %v715
        %v734 = vsub.f32 %v702, %v715
        %v735 = vsub.f32 %v647, %v720
        %v736 = vsub.f32 %v666, %v720
        %v737 = vsub.f32 %v685, %v720
        %v738 = vsub.f32 %v704, %v720
        %v739 = vsub.f32 %v650, %v725
        %v740 = vsub.f32 %v669, %v725
        %v741 = vsub.f32 %v688, %v725
        %v742 = vsub.f32 %v707, %v725
        %v743 = vsub.f32 %v652, %v730
        %v744 = vsub.f32 %v671, %v730
        %v745 = vsub.f32 %v690, %v730
        %v746 = vsub.f32 %v709, %v730
        %v747 = vmul.f32 %v731, 1.442695
        %v748 = vpow.pop %v747
        %v749 = vmul.f32 %v732, 1.442695
        %v750 = vpow.pop %v749
        %v751 = vmul.f32 %v733, 1.442695
        %v752 = vpow.pop %v751
        %v753 = vmul.f32 %v734, 1.442695
        %v754 = vpow.pop %v753
        %v755 = vmul.f32 %v735, 1.442695
        %v756 = vpow.pop %v755
        %v757 = vmul.f32 %v736, 1.442695
        %v758 = vpow.pop %v757
        %v759 = vmul.f32 %v737, 1.442695
        %v760 = vpow.pop %v759
        %v761 = vmul.f32 %v738, 1.442695
        %v762 = vpow.pop %v761
        %v763 = vmul.f32 %v739, 1.442695
        %v764 = vpow.pop %v763
        %v765 = vmul.f32 %v740, 1.442695
        %v766 = vpow.pop %v765
        %v767 = vmul.f32 %v741, 1.442695
        %v768 = vpow.pop %v767
        %v769 = vmul.f32 %v742, 1.442695
        %v770 = vpow.pop %v769
        %v771 = vmul.f32 %v743, 1.442695
        %v772 = vpow.pop %v771
        %v773 = vmul.f32 %v744, 1.442695
        %v774 = vpow.pop %v773
        %v775 = vmul.f32 %v745, 1.442695
        %v776 = vpow.pop %v775
        %v777 = vmul.f32 %v746, 1.442695
        %v778 = vpow.pop %v777
        %v779 = vadd.f32 %v748, %v750
        %v780 = vadd.f32 %v779, %v752
        %v781 = vadd.f32 %v780, %v754
        %782 = vadd.xlane.f32.xlu0 %v781
        %v783 = vpop.xlane.xlu0 %782
        %v784 = vadd.f32 %v756, %v758
        %v785 = vadd.f32 %v784, %v760
        %v786 = vadd.f32 %v785, %v762
        %787 = vadd.xlane.f32.xlu0 %v786
        %v788 = vpop.xlane.xlu0 %787
        %v789 = vadd.f32 %v764, %v766
        %v790 = vadd.f32 %v789, %v768
        %v791 = vadd.f32 %v790, %v770
        %792 = vadd.xlane.f32.xlu0 %v791
        %v793 = vpop.xlane.xlu0 %792
        %v794 = vadd.f32 %v772, %v774
        %v795 = vadd.f32 %v794, %v776
        %v796 = vadd.f32 %v795, %v778
        %797 = vadd.xlane.f32.xlu0 %v796
        %v798 = vpop.xlane.xlu0 %797
        %v799 = vld [vmem:[%s296] sm:$0xff]
        %v800 = vld [vmem:[%s296 + $0x8] sm:$0xff]
        %v801 = vld [vmem:[%s296 + $0x10] sm:$0xff]
        %v802 = vld [vmem:[%s296 + $0x18] sm:$0xff]
        %v803 = vunpack.c.0.s8 %v799
        %v804 = vunpack.c.0.s8 %v800
        %v805 = vunpack.c.0.s8 %v801
        %v806 = vunpack.c.0.s8 %v802
        %v807 = vunpack.c.1.s8 %v799
        %v808 = vunpack.c.1.s8 %v800
        %v809 = vunpack.c.1.s8 %v801
        %v810 = vunpack.c.1.s8 %v802
        %v811 = vunpack.c.2.s8 %v799
        %v812 = vunpack.c.2.s8 %v800
        %v813 = vunpack.c.2.s8 %v801
        %v814 = vunpack.c.2.s8 %v802
        %v815 = vunpack.c.3.s8 %v799
        %v816 = vunpack.c.3.s8 %v800
        %v817 = vunpack.c.3.s8 %v801
        %v818 = vunpack.c.3.s8 %v802
        %v819 = vcvt.s32.f32 %v803
        %v820 = vcvt.s32.f32 %v804
        %v821 = vcvt.s32.f32 %v805
        %v822 = vcvt.s32.f32 %v806
        %v823 = vcvt.s32.f32 %v807
        %v824 = vcvt.s32.f32 %v808
        %v825 = vcvt.s32.f32 %v809
        %v826 = vcvt.s32.f32 %v810
        %v827 = vcvt.s32.f32 %v811
        %v828 = vcvt.s32.f32 %v812
        %v829 = vcvt.s32.f32 %v813
        %v830 = vcvt.s32.f32 %v814
        %v831 = vcvt.s32.f32 %v815
        %v832 = vcvt.s32.f32 %v816
        %v833 = vcvt.s32.f32 %v817
        %v834 = vcvt.s32.f32 %v818
        %v835 = vmul.f32 %v748, %v819
        %v836 = vmul.f32 %v750, %v820
        %v837 = vmul.f32 %v752, %v821
        %v838 = vmul.f32 %v754, %v822
        %v839 = vmul.f32 %v756, %v823
        %v840 = vmul.f32 %v758, %v824
        %v841 = vmul.f32 %v760, %v825
        %v842 = vmul.f32 %v762, %v826
        %v843 = vmul.f32 %v764, %v827
        %v844 = vmul.f32 %v766, %v828
        %v845 = vmul.f32 %v768, %v829
        %v846 = vmul.f32 %v770, %v830
        %v847 = vmul.f32 %v772, %v831
        %v848 = vmul.f32 %v774, %v832
        %v849 = vmul.f32 %v776, %v833
        %v850 = vmul.f32 %v778, %v834
        %v851 = vpack.c.bf16 %v839, %v835
        %v852 = vpack.c.bf16 %v840, %v836
        %v853 = vpack.c.bf16 %v841, %v837
        %v854 = vpack.c.bf16 %v842, %v838
        %v855 = vpack.c.bf16 %v847, %v843
        %v856 = vpack.c.bf16 %v848, %v844
        %v857 = vpack.c.bf16 %v849, %v845
        %v858 = vpack.c.bf16 %v850, %v846
        %v859 = vld [vmem:[%s240] sm:$0xff]
        %v860 = vld [vmem:[%s240 + $0x8] sm:$0xff]
        %v861 = vld [vmem:[%s240 + $0x10] sm:$0xff]
        %v862 = vld [vmem:[%s240 + $0x18] sm:$0xff]
        %v863 = vld [vmem:[%s240 + $0x20] sm:$0xff]
        %v864 = vld [vmem:[%s240 + $0x28] sm:$0xff]
        %v865 = vld [vmem:[%s240 + $0x30] sm:$0xff]
        %v866 = vld [vmem:[%s240 + $0x38] sm:$0xff]
        %v867 = vld [vmem:[%s240 + $0x40] sm:$0xff]
        %v868 = vld [vmem:[%s240 + $0x48] sm:$0xff]
        %v869 = vld [vmem:[%s240 + $0x50] sm:$0xff]
        %v870 = vld [vmem:[%s240 + $0x58] sm:$0xff]
        %v871 = vld [vmem:[%s240 + $0x60] sm:$0xff]
        %v872 = vld [vmem:[%s240 + $0x68] sm:$0xff]
        %v873 = vld [vmem:[%s240 + $0x70] sm:$0xff]
        %v874 = vld [vmem:[%s240 + $0x78] sm:$0xff]
        %v875 = vld [vmem:[%s240 + $0x80] sm:$0xff]
        %v876 = vld [vmem:[%s240 + $0x88] sm:$0xff]
        %v877 = vld [vmem:[%s240 + $0x90] sm:$0xff]
        %v878 = vld [vmem:[%s240 + $0x98] sm:$0xff]
        %v879 = vld [vmem:[%s240 + $0xa0] sm:$0xff]
        %v880 = vld [vmem:[%s240 + $0xa8] sm:$0xff]
        %v881 = vld [vmem:[%s240 + $0xb0] sm:$0xff]
        %v882 = vld [vmem:[%s240 + $0xb8] sm:$0xff]
        %v883 = vld [vmem:[%s240 + $0xc0] sm:$0xff]
        %v884 = vld [vmem:[%s240 + $0xc8] sm:$0xff]
        %v885 = vld [vmem:[%s240 + $0xd0] sm:$0xff]
        %v886 = vld [vmem:[%s240 + $0xd8] sm:$0xff]
        %v887 = vld [vmem:[%s240 + $0xe0] sm:$0xff]
        %v888 = vld [vmem:[%s240 + $0xe8] sm:$0xff]
        %v889 = vld [vmem:[%s240 + $0xf0] sm:$0xff]
        %v890 = vld [vmem:[%s240 + $0xf8] sm:$0xff]
        %v891 = vld [vmem:[%s240 + $0x100] sm:$0xff]
        %v892 = vld [vmem:[%s240 + $0x108] sm:$0xff]
        %v893 = vld [vmem:[%s240 + $0x110] sm:$0xff]
        %v894 = vld [vmem:[%s240 + $0x118] sm:$0xff]
        %v895 = vld [vmem:[%s240 + $0x120] sm:$0xff]
        %v896 = vld [vmem:[%s240 + $0x128] sm:$0xff]
        %v897 = vld [vmem:[%s240 + $0x130] sm:$0xff]
        %v898 = vld [vmem:[%s240 + $0x138] sm:$0xff]
        %v899 = vld [vmem:[%s240 + $0x140] sm:$0xff]
        %v900 = vld [vmem:[%s240 + $0x148] sm:$0xff]
        %v901 = vld [vmem:[%s240 + $0x150] sm:$0xff]
        %v902 = vld [vmem:[%s240 + $0x158] sm:$0xff]
        %v903 = vld [vmem:[%s240 + $0x160] sm:$0xff]
        %v904 = vld [vmem:[%s240 + $0x168] sm:$0xff]
        %v905 = vld [vmem:[%s240 + $0x170] sm:$0xff]
        %v906 = vld [vmem:[%s240 + $0x178] sm:$0xff]
        %v907 = vld [vmem:[%s240 + $0x180] sm:$0xff]
        %v908 = vld [vmem:[%s240 + $0x188] sm:$0xff]
        %v909 = vld [vmem:[%s240 + $0x190] sm:$0xff]
        %v910 = vld [vmem:[%s240 + $0x198] sm:$0xff]
        %v911 = vld [vmem:[%s240 + $0x1a0] sm:$0xff]
        %v912 = vld [vmem:[%s240 + $0x1a8] sm:$0xff]
        %v913 = vld [vmem:[%s240 + $0x1b0] sm:$0xff]
        %v914 = vld [vmem:[%s240 + $0x1b8] sm:$0xff]
        %v915 = vld [vmem:[%s240 + $0x1c0] sm:$0xff]
        %v916 = vld [vmem:[%s240 + $0x1c8] sm:$0xff]
        %v917 = vld [vmem:[%s240 + $0x1d0] sm:$0xff]
        %v918 = vld [vmem:[%s240 + $0x1d8] sm:$0xff]
        %v919 = vld [vmem:[%s240 + $0x1e0] sm:$0xff]
        %v920 = vld [vmem:[%s240 + $0x1e8] sm:$0xff]
        %v921 = vld [vmem:[%s240 + $0x1f0] sm:$0xff]
        %v922 = vld [vmem:[%s240 + $0x1f8] sm:$0xff]
        %v987 = vunpack.c.l.b16 %v859
        %v988 = vunpack.c.h.b16 %v859
        %v989 = vunpack.c.l.b16 %v860
        %v990 = vunpack.c.h.b16 %v860
        %v991 = vunpack.c.l.b16 %v861
        %v992 = vunpack.c.h.b16 %v861
        %v993 = vunpack.c.l.b16 %v862
        %v994 = vunpack.c.h.b16 %v862
        %v995 = vunpack.c.l.b16 %v863
        %v996 = vunpack.c.h.b16 %v863
        %v997 = vunpack.c.l.b16 %v864
        %v998 = vunpack.c.h.b16 %v864
        %v999 = vunpack.c.l.b16 %v865
        %v1000 = vunpack.c.h.b16 %v865
        %v1001 = vunpack.c.l.b16 %v866
        %v1002 = vunpack.c.h.b16 %v866
        %v1003 = vunpack.c.l.b16 %v867
        %v1004 = vunpack.c.h.b16 %v867
        %v1005 = vunpack.c.l.b16 %v868
        %v1006 = vunpack.c.h.b16 %v868
        %v1007 = vunpack.c.l.b16 %v869
        %v1008 = vunpack.c.h.b16 %v869
        %v1009 = vunpack.c.l.b16 %v870
        %v1010 = vunpack.c.h.b16 %v870
        %v1011 = vunpack.c.l.b16 %v871
        %v1012 = vunpack.c.h.b16 %v871
        %v1013 = vunpack.c.l.b16 %v872
        %v1014 = vunpack.c.h.b16 %v872
        %v1015 = vunpack.c.l.b16 %v873
        %v1016 = vunpack.c.h.b16 %v873
        %v1017 = vunpack.c.l.b16 %v874
        %v1018 = vunpack.c.h.b16 %v874
        %v1019 = vunpack.c.l.b16 %v875
        %v1020 = vunpack.c.h.b16 %v875
        %v1021 = vunpack.c.l.b16 %v876
        %v1022 = vunpack.c.h.b16 %v876
        %v1023 = vunpack.c.l.b16 %v877
        %v1024 = vunpack.c.h.b16 %v877
        %v1025 = vunpack.c.l.b16 %v878
        %v1026 = vunpack.c.h.b16 %v878
        %v1027 = vunpack.c.l.b16 %v879
        %v1028 = vunpack.c.h.b16 %v879
        %v1029 = vunpack.c.l.b16 %v880
        %v1030 = vunpack.c.h.b16 %v880
        %v1031 = vunpack.c.l.b16 %v881
        %v1032 = vunpack.c.h.b16 %v881
        %v1033 = vunpack.c.l.b16 %v882
        %v1034 = vunpack.c.h.b16 %v882
        %v1035 = vunpack.c.l.b16 %v883
        %v1036 = vunpack.c.h.b16 %v883
        %v1037 = vunpack.c.l.b16 %v884
        %v1038 = vunpack.c.h.b16 %v884
        %v1039 = vunpack.c.l.b16 %v885
        %v1040 = vunpack.c.h.b16 %v885
        %v1041 = vunpack.c.l.b16 %v886
        %v1042 = vunpack.c.h.b16 %v886
        %v1043 = vunpack.c.l.b16 %v887
        %v1044 = vunpack.c.h.b16 %v887
        %v1045 = vunpack.c.l.b16 %v888
        %v1046 = vunpack.c.h.b16 %v888
        %v1047 = vunpack.c.l.b16 %v889
        %v1048 = vunpack.c.h.b16 %v889
        %v1049 = vunpack.c.l.b16 %v890
        %v1050 = vunpack.c.h.b16 %v890
        %v1051 = vunpack.c.l.b16 %v891
        %v1052 = vunpack.c.h.b16 %v891
        %v1053 = vunpack.c.l.b16 %v892
        %v1054 = vunpack.c.h.b16 %v892
        %v1055 = vunpack.c.l.b16 %v893
        %v1056 = vunpack.c.h.b16 %v893
        %v1057 = vunpack.c.l.b16 %v894
        %v1058 = vunpack.c.h.b16 %v894
        %v1059 = vunpack.c.l.b16 %v895
        %v1060 = vunpack.c.h.b16 %v895
        %v1061 = vunpack.c.l.b16 %v896
        %v1062 = vunpack.c.h.b16 %v896
        %v1063 = vunpack.c.l.b16 %v897
        %v1064 = vunpack.c.h.b16 %v897
        %v1065 = vunpack.c.l.b16 %v898
        %v1066 = vunpack.c.h.b16 %v898
        %v1067 = vunpack.c.l.b16 %v899
        %v1068 = vunpack.c.h.b16 %v899
        %v1069 = vunpack.c.l.b16 %v900
        %v1070 = vunpack.c.h.b16 %v900
        %v1071 = vunpack.c.l.b16 %v901
        %v1072 = vunpack.c.h.b16 %v901
        %v1073 = vunpack.c.l.b16 %v902
        %v1074 = vunpack.c.h.b16 %v902
        %v1075 = vunpack.c.l.b16 %v903
        %v1076 = vunpack.c.h.b16 %v903
        %v1077 = vunpack.c.l.b16 %v904
        %v1078 = vunpack.c.h.b16 %v904
        %v1079 = vunpack.c.l.b16 %v905
        %v1080 = vunpack.c.h.b16 %v905
        %v1081 = vunpack.c.l.b16 %v906
        %v1082 = vunpack.c.h.b16 %v906
        %v1083 = vunpack.c.l.b16 %v907
        %v1084 = vunpack.c.h.b16 %v907
        %v1085 = vunpack.c.l.b16 %v908
        %v1086 = vunpack.c.h.b16 %v908
        %v1087 = vunpack.c.l.b16 %v909
        %v1088 = vunpack.c.h.b16 %v909
        %v1089 = vunpack.c.l.b16 %v910
        %v1090 = vunpack.c.h.b16 %v910
        %v1091 = vunpack.c.l.b16 %v911
        %v1092 = vunpack.c.h.b16 %v911
        %v1093 = vunpack.c.l.b16 %v912
        %v1094 = vunpack.c.h.b16 %v912
        %v1095 = vunpack.c.l.b16 %v913
        %v1096 = vunpack.c.h.b16 %v913
        %v1097 = vunpack.c.l.b16 %v914
        %v1098 = vunpack.c.h.b16 %v914
        %v1099 = vunpack.c.l.b16 %v915
        %v1100 = vunpack.c.h.b16 %v915
        %v1101 = vunpack.c.l.b16 %v916
        %v1102 = vunpack.c.h.b16 %v916
        %v1103 = vunpack.c.l.b16 %v917
        %v1104 = vunpack.c.h.b16 %v917
        %v1105 = vunpack.c.l.b16 %v918
        %v1106 = vunpack.c.h.b16 %v918
        %v1107 = vunpack.c.l.b16 %v919
        %v1108 = vunpack.c.h.b16 %v919
        %v1109 = vunpack.c.l.b16 %v920
        %v1110 = vunpack.c.h.b16 %v920
        %v1111 = vunpack.c.l.b16 %v921
        %v1112 = vunpack.c.h.b16 %v921
        %v1113 = vunpack.c.l.b16 %v922
        %v1114 = vunpack.c.h.b16 %v922
        %v1115 = vpack.c.b16 %v989, %v987
        %v1116 = vpack.c.b16 %v990, %v988
        %v1117 = vpack.c.b16 %v993, %v991
        %v1118 = vpack.c.b16 %v994, %v992
        %v1119 = vpack.c.b16 %v997, %v995
        %v1120 = vpack.c.b16 %v998, %v996
        %v1121 = vpack.c.b16 %v1001, %v999
        %v1122 = vpack.c.b16 %v1002, %v1000
        %v1123 = vpack.c.b16 %v1005, %v1003
        %v1124 = vpack.c.b16 %v1006, %v1004
        %v1125 = vpack.c.b16 %v1009, %v1007
        %v1126 = vpack.c.b16 %v1010, %v1008
        %v1127 = vpack.c.b16 %v1013, %v1011
        %v1128 = vpack.c.b16 %v1014, %v1012
        %v1129 = vpack.c.b16 %v1017, %v1015
        %v1130 = vpack.c.b16 %v1018, %v1016
        %v1131 = vpack.c.b16 %v1021, %v1019
        %v1132 = vpack.c.b16 %v1022, %v1020
        %v1133 = vpack.c.b16 %v1025, %v1023
        %v1134 = vpack.c.b16 %v1026, %v1024
        %v1135 = vpack.c.b16 %v1029, %v1027
        %v1136 = vpack.c.b16 %v1030, %v1028
        %v1137 = vpack.c.b16 %v1033, %v1031
        %v1138 = vpack.c.b16 %v1034, %v1032
        %v1139 = vpack.c.b16 %v1037, %v1035
        %v1140 = vpack.c.b16 %v1038, %v1036
        %v1141 = vpack.c.b16 %v1041, %v1039
        %v1142 = vpack.c.b16 %v1042, %v1040
        %v1143 = vpack.c.b16 %v1045, %v1043
        %v1144 = vpack.c.b16 %v1046, %v1044
        %v1145 = vpack.c.b16 %v1049, %v1047
        %v1146 = vpack.c.b16 %v1050, %v1048
        %v1147 = vpack.c.b16 %v1053, %v1051
        %v1148 = vpack.c.b16 %v1054, %v1052
        %v1149 = vpack.c.b16 %v1057, %v1055
        %v1150 = vpack.c.b16 %v1058, %v1056
        %v1151 = vpack.c.b16 %v1061, %v1059
        %v1152 = vpack.c.b16 %v1062, %v1060
        %v1153 = vpack.c.b16 %v1065, %v1063
        %v1154 = vpack.c.b16 %v1066, %v1064
        %v1155 = vpack.c.b16 %v1069, %v1067
        %v1156 = vpack.c.b16 %v1070, %v1068
        %v1157 = vpack.c.b16 %v1073, %v1071
        %v1158 = vpack.c.b16 %v1074, %v1072
        %v1159 = vpack.c.b16 %v1077, %v1075
        %v1160 = vpack.c.b16 %v1078, %v1076
        %v1161 = vpack.c.b16 %v1081, %v1079
        %v1162 = vpack.c.b16 %v1082, %v1080
        %v1163 = vpack.c.b16 %v1085, %v1083
        %v1164 = vpack.c.b16 %v1086, %v1084
        %v1165 = vpack.c.b16 %v1089, %v1087
        %v1166 = vpack.c.b16 %v1090, %v1088
        %v1167 = vpack.c.b16 %v1093, %v1091
        %v1168 = vpack.c.b16 %v1094, %v1092
        %v1169 = vpack.c.b16 %v1097, %v1095
        %v1170 = vpack.c.b16 %v1098, %v1096
        %v1171 = vpack.c.b16 %v1101, %v1099
        %v1172 = vpack.c.b16 %v1102, %v1100
        %v1173 = vpack.c.b16 %v1105, %v1103
        %v1174 = vpack.c.b16 %v1106, %v1104
        %v1175 = vpack.c.b16 %v1109, %v1107
        %v1176 = vpack.c.b16 %v1110, %v1108
        %v1177 = vpack.c.b16 %v1113, %v1111
        %v1178 = vpack.c.b16 %v1114, %v1112
        %1243 = vmatpush.bf16.msra.mxu0 %v1129
        %1244 = vmatpush.bf16.msra.mxu0 %v1127
        %1245 = vmatpush.bf16.msra.mxu0 %v1125
        %1246 = vmatpush.bf16.msra.mxu0 %v1123
        %1247 = vmatpush.bf16.msra.mxu0 %v1121
        %1248 = vmatpush.bf16.msra.mxu0 %v1119
        %1249 = vmatpush.bf16.msra.mxu0 %v1117
        %1250 = vmatpush.bf16.msra.mxu0 %v1115
        %1251 = vmatmul.bf16.gmra.mxu0 %v851
        %v1252 = vpop.f32.mrf.mxu0
        %v1253 = vadd.f32 0.0, %v1252
        %v1254 = vpop.f32.mrf.mxu0
        %v1255 = vadd.f32 0.0, %v1254
        %1256 = vmatmul.bf16.gmra.mxu0 %v855
        %v1257 = vpop.f32.mrf.mxu0
        %v1258 = vadd.f32 0.0, %v1257
        %v1259 = vpop.f32.mrf.mxu0
        %v1260 = vadd.f32 0.0, %v1259
        %1261 = vdwg.mxu0
        %1262 = vmatpush.bf16.msra.mxu0 %v1145
        %1263 = vmatpush.bf16.msra.mxu0 %v1143
        %1264 = vmatpush.bf16.msra.mxu0 %v1141
        %1265 = vmatpush.bf16.msra.mxu0 %v1139
        %1266 = vmatpush.bf16.msra.mxu0 %v1137
        %1267 = vmatpush.bf16.msra.mxu0 %v1135
        %1268 = vmatpush.bf16.msra.mxu0 %v1133
        %1269 = vmatpush.bf16.msra.mxu0 %v1131
        %1270 = vmatmul.bf16.gmra.mxu0 %v852
        %v1271 = vpop.f32.mrf.mxu0
        %v1272 = vadd.f32 %v1253, %v1271
        %v1273 = vpop.f32.mrf.mxu0
        %v1274 = vadd.f32 %v1255, %v1273
        %1275 = vmatmul.bf16.gmra.mxu0 %v856
        %v1276 = vpop.f32.mrf.mxu0
        %v1277 = vadd.f32 %v1258, %v1276
        %v1278 = vpop.f32.mrf.mxu0
        %v1279 = vadd.f32 %v1260, %v1278
        %1280 = vdwg.mxu0
        %1281 = vmatpush.bf16.msra.mxu0 %v1161
        %1282 = vmatpush.bf16.msra.mxu0 %v1159
        %1283 = vmatpush.bf16.msra.mxu0 %v1157
        %1284 = vmatpush.bf16.msra.mxu0 %v1155
        %1285 = vmatpush.bf16.msra.mxu0 %v1153
        %1286 = vmatpush.bf16.msra.mxu0 %v1151
        %1287 = vmatpush.bf16.msra.mxu0 %v1149
        %1288 = vmatpush.bf16.msra.mxu0 %v1147
        %1289 = vmatmul.bf16.gmra.mxu0 %v853
        %v1290 = vpop.f32.mrf.mxu0
        %v1291 = vadd.f32 %v1272, %v1290
        %v1292 = vpop.f32.mrf.mxu0
        %v1293 = vadd.f32 %v1274, %v1292
        %1294 = vmatmul.bf16.gmra.mxu0 %v857
        %v1295 = vpop.f32.mrf.mxu0
        %v1296 = vadd.f32 %v1277, %v1295
        %v1297 = vpop.f32.mrf.mxu0
        %v1298 = vadd.f32 %v1279, %v1297
        %1299 = vdwg.mxu0
        %1300 = vmatpush.bf16.msra.mxu0 %v1177
        %1301 = vmatpush.bf16.msra.mxu0 %v1175
        %1302 = vmatpush.bf16.msra.mxu0 %v1173
        %1303 = vmatpush.bf16.msra.mxu0 %v1171
        %1304 = vmatpush.bf16.msra.mxu0 %v1169
        %1305 = vmatpush.bf16.msra.mxu0 %v1167
        %1306 = vmatpush.bf16.msra.mxu0 %v1165
        %1307 = vmatpush.bf16.msra.mxu0 %v1163
        %1308 = vmatmul.bf16.gmra.mxu0 %v854
        %v1309 = vpop.f32.mrf.mxu0
        %v1310 = vadd.f32 %v1291, %v1309
        %v1311 = vpop.f32.mrf.mxu0
        %v1312 = vadd.f32 %v1293, %v1311
        %1313 = vmatmul.bf16.gmra.mxu0 %v858
        %v1314 = vpop.f32.mrf.mxu0
        %v1315 = vadd.f32 %v1296, %v1314
        %v1316 = vpop.f32.mrf.mxu0
        %v1317 = vadd.f32 %v1298, %v1316
        %1318 = vdwg.mxu0
        %1319 = vmatpush.bf16.msra.mxu0 %v1130
        %1320 = vmatpush.bf16.msra.mxu0 %v1128
        %1321 = vmatpush.bf16.msra.mxu0 %v1126
        %1322 = vmatpush.bf16.msra.mxu0 %v1124
        %1323 = vmatpush.bf16.msra.mxu0 %v1122
        %1324 = vmatpush.bf16.msra.mxu0 %v1120
        %1325 = vmatpush.bf16.msra.mxu0 %v1118
        %1326 = vmatpush.bf16.msra.mxu0 %v1116
        %1327 = vmatmul.bf16.gmra.mxu0 %v851
        %v1328 = vpop.f32.mrf.mxu0
        %v1329 = vadd.f32 0.0, %v1328
        %v1330 = vpop.f32.mrf.mxu0
        %v1331 = vadd.f32 0.0, %v1330
        %1332 = vmatmul.bf16.gmra.mxu0 %v855
        %v1333 = vpop.f32.mrf.mxu0
        %v1334 = vadd.f32 0.0, %v1333
        %v1335 = vpop.f32.mrf.mxu0
        %v1336 = vadd.f32 0.0, %v1335
        %1337 = vdwg.mxu0
        %1338 = vmatpush.bf16.msra.mxu0 %v1146
        %1339 = vmatpush.bf16.msra.mxu0 %v1144
        %1340 = vmatpush.bf16.msra.mxu0 %v1142
        %1341 = vmatpush.bf16.msra.mxu0 %v1140
        %1342 = vmatpush.bf16.msra.mxu0 %v1138
        %1343 = vmatpush.bf16.msra.mxu0 %v1136
        %1344 = vmatpush.bf16.msra.mxu0 %v1134
        %1345 = vmatpush.bf16.msra.mxu0 %v1132
        %1346 = vmatmul.bf16.gmra.mxu0 %v852
        %v1347 = vpop.f32.mrf.mxu0
        %v1348 = vadd.f32 %v1329, %v1347
        %v1349 = vpop.f32.mrf.mxu0
        %v1350 = vadd.f32 %v1331, %v1349
        %1351 = vmatmul.bf16.gmra.mxu0 %v856
        %v1352 = vpop.f32.mrf.mxu0
        %v1353 = vadd.f32 %v1334, %v1352
        %v1354 = vpop.f32.mrf.mxu0
        %v1355 = vadd.f32 %v1336, %v1354
        %1356 = vdwg.mxu0
        %1357 = vmatpush.bf16.msra.mxu0 %v1162
        %1358 = vmatpush.bf16.msra.mxu0 %v1160
        %1359 = vmatpush.bf16.msra.mxu0 %v1158
        %1360 = vmatpush.bf16.msra.mxu0 %v1156
        %1361 = vmatpush.bf16.msra.mxu0 %v1154
        %1362 = vmatpush.bf16.msra.mxu0 %v1152
        %1363 = vmatpush.bf16.msra.mxu0 %v1150
        %1364 = vmatpush.bf16.msra.mxu0 %v1148
        %1365 = vmatmul.bf16.gmra.mxu0 %v853
        %v1366 = vpop.f32.mrf.mxu0
        %v1367 = vadd.f32 %v1348, %v1366
        %v1368 = vpop.f32.mrf.mxu0
        %v1369 = vadd.f32 %v1350, %v1368
        %1370 = vmatmul.bf16.gmra.mxu0 %v857
        %v1371 = vpop.f32.mrf.mxu0
        %v1372 = vadd.f32 %v1353, %v1371
        %v1373 = vpop.f32.mrf.mxu0
        %v1374 = vadd.f32 %v1355, %v1373
        %1375 = vdwg.mxu0
        %1376 = vmatpush.bf16.msra.mxu0 %v1178
        %1377 = vmatpush.bf16.msra.mxu0 %v1176
        %1378 = vmatpush.bf16.msra.mxu0 %v1174
        %1379 = vmatpush.bf16.msra.mxu0 %v1172
        %1380 = vmatpush.bf16.msra.mxu0 %v1170
        %1381 = vmatpush.bf16.msra.mxu0 %v1168
        %1382 = vmatpush.bf16.msra.mxu0 %v1166
        %1383 = vmatpush.bf16.msra.mxu0 %v1164
        %1384 = vmatmul.bf16.gmra.mxu0 %v854
        %v1385 = vpop.f32.mrf.mxu0
        %v1386 = vadd.f32 %v1367, %v1385
        %v1387 = vpop.f32.mrf.mxu0
        %v1388 = vadd.f32 %v1369, %v1387
        %1389 = vmatmul.bf16.gmra.mxu0 %v858
        %v1390 = vpop.f32.mrf.mxu0
        %v1391 = vadd.f32 %v1372, %v1390
        %v1392 = vpop.f32.mrf.mxu0
        %v1393 = vadd.f32 %v1374, %v1392
        %1394 = vdwg.mxu0
        %v1395 = vrcp.pop %v783
        %v1396 = vrcp.pop %v788
        %v1397 = vrcp.pop %v793
        %v1398 = vrcp.pop %v798
        %v1399 = vmul.f32 %v1395, 1.1428572
        %v1400 = vmul.f32 %v1396, 1.1428572
        %v1401 = vmul.f32 %v1397, 1.1428572
        %v1402 = vmul.f32 %v1398, 1.1428572
        %v1403 = vmul.f32 %v1310, %v1399
        %v1404 = vmul.f32 %v1386, %v1399
        %v1405 = vmul.f32 %v1312, %v1400
        %v1406 = vmul.f32 %v1388, %v1400
        %v1407 = vmul.f32 %v1315, %v1401
        %v1408 = vmul.f32 %v1391, %v1401
        %v1409 = vmul.f32 %v1317, %v1402
        %v1410 = vmul.f32 %v1393, %v1402
        %1411 = vst [vmem:[%s280] sm:$0xff] %v1403
        %1412 = vst [vmem:[%s280 + $0x8] sm:$0xff] %v1404
        %1413 = vst [vmem:[%s280 + $0x10] sm:$0xff] %v1405
        %1414 = vst [vmem:[%s280 + $0x18] sm:$0xff] %v1406
        %1415 = vst [vmem:[%s280 + $0x20] sm:$0xff] %v1407
        %1416 = vst [vmem:[%s280 + $0x28] sm:$0xff] %v1408
        %1417 = vst [vmem:[%s280 + $0x30] sm:$0xff] %v1409
        %1418 = vst [vmem:[%s280 + $0x38] sm:$0xff] %v1410
        %s1419 = sand.u32 %s149, 1
        %s1420 = scalar_lea.sflag [#allocation4], %s1419
        %s1421 = sand.u32 %s149, 1
        %s1422 = smul.addr %s1421, 64
        %s1423 = scalar_lea.vmem [#allocation5], %s1422
        // Predicated region
        $region41: #{tpu_custom_call.1} parent=35 // pred_check
          %p1424 = pneg %p159
        $region42: #{tpu_custom_call.1} parent=35 // pred_check_branch
          %1426 = sbr.rel (%p1424) target = $region44
        $region43: #{tpu_custom_call.1} parent=35 // pred_region
          %s1427 = smul.u32 2, %s26
          %1429 = vsyncadd %s1420, 0
          %s1430 = smul.addr %s25, 16
          %s1431 = sadd.s32 %s1427, %s1430
          %s1432 = smul.addr %s1431, 8
          %s1433 = scalar_lea.hbm %s4, %s1432
          %s1434 = sshll.u32 %s1423, 4
          %s1435 = int_to_ptr.vmem [resolvable:$true] %s1434
          %s1436 = sshll.u32 %s1433, 4
          %s1437 = int_to_ptr.hbm [resolvable:$true] %s1436
          %1442 = dma.vmem_to_hbm [thread:$0]  %s1435, 1024, %s1437, %s1420, 256, 512, 16
        $region44: #{tpu_custom_call.1} parent=35 // pred_fallthru
          _
      $region36: #{tpu_custom_call.1} parent=5 // pred_fallthru
        _
      %p1443 = scmp.le.s32.totalorder 2, %s16
      // Predicated region
      $region45: #{tpu_custom_call.1} parent=5 // pred_check
        %p1444 = pneg %p1443
      $region46: #{tpu_custom_call.1} parent=5 // pred_check_branch
        %1446 = sbr.rel (%p1444) target = $region48
      $region47: #{tpu_custom_call.1} parent=5 // pred_region
        %s1447 = ssub.s32 %s16, 2
        // Predicated region
        $region49: #{tpu_custom_call.1} parent=47 // pred_check
          %p1448 = pneg %p165
        $region50: #{tpu_custom_call.1} parent=47 // pred_check_branch
          %1450 = sbr.rel (%p1448) target = $region52
        $region51: #{tpu_custom_call.1} parent=47 // pred_region
          %s1451 = sand.u32 %s150, 1
          %s1452 = scalar_lea.sflag [#allocation4], %s1451
          %s1453 = sand.u32 %s150, 1
          %s1454 = smul.addr %s1453, 64
          %s1455 = scalar_lea.vmem [#allocation5], %s1454
          %1457 = dma.done %s1452, 1024
        $region52: #{tpu_custom_call.1} parent=47 // pred_fallthru
          _
      $region48: #{tpu_custom_call.1} parent=5 // pred_fallthru
        _
    $region6: #{tpu_custom_call.1} parent=1 // loop_footer
      %s20 = sadd.s32 1, %s16
    $region7: #{tpu_custom_call.1} parent=1 // loop_footer_branch
      %15 = sbr.rel target = $region3
    $region8: #{tpu_custom_call.1} parent=1 // loop_exit
      _
    %1458 = vsyncpa [#allocation3], 1
    %s1459 = scalar_lea.sflag [#allocation3], 1
    %1460 = vsyncpa %s1459, 1
    %1461 = vsyncpa [#allocation4], 1
    %s1462 = scalar_lea.sflag [#allocation4], 1
    %1463 = vsyncpa %s1462, 1

</llo_original>
